<compile_context>
chip_gen: v7x
topology: tpu7x:2x2x1
jax: 0.10.0
libtpu: 0.0.40
codegen_flags: <defaults>
</compile_context>

<pallas_src>
import jax
import jax.numpy as jnp
from jax import lax
from jax.experimental import pallas as pl
from jax.experimental.pallas import tpu as pltpu

INPUT_DIM = 2
HIDDEN = 136
OUTPUT_DIM = 68


def _rnn_kernel(x_ref, wih_ref, whh_ref, b_ref, fcw_ref, fcb_ref, out_ref):
    seq = x_ref.shape[0]

    # Loop-invariant values, hoisted once (JAX does not CSE these in the loop).
    w0 = wih_ref[0:1, :]           # (1, HID) input-proj row for feature 0
    w1 = wih_ref[1:2, :]           # (1, HID) input-proj row for feature 1
    bias = b_ref[...]              # (1, HID) combined b_ih + b_hh

    def step(t, h):
        # Two scalar feature reads from SMEM (scalar slot, off critical path).
        x0 = x_ref[t, 0]
        x1 = x_ref[t, 1]
        # Recurrent matvec on the MXU; the VPU FMAs below are free filler
        # hidden under the MXU + tanh (EUP) latency.
        hh = jnp.dot(h, whh_ref[...], preferred_element_type=jnp.float32)
        pre = bias + x0 * w0 + x1 * w1 + hh
        return jnp.tanh(pre)

    # Hidden state stays in vregs as the loop carry; fully unrolled so the
    # scheduler sees across timesteps.
    h0 = jnp.zeros((1, HIDDEN), jnp.float32)
    h_last = lax.fori_loop(0, seq, step, h0, unroll=True)

    # Final fully-connected layer on the last hidden state.
    out_ref[...] = (
        jnp.dot(h_last, fcw_ref[...], preferred_element_type=jnp.float32)
        + fcb_ref[...]
    )


def fm_depth_rnn_forward(x, params):
    """x: (seq, 2) float32.  Returns (68,) float32 — matches module.forward."""
    x = x.astype(jnp.float32)
    seq = x.shape[0]
    assert x.shape == (seq, INPUT_DIM)

    # Fold biases and transpose weights to the kernel layout (plain-JAX glue).
    b = (params["b_ih"] + params["b_hh"]).reshape(1, HIDDEN)
    wih_t = jnp.transpose(params["w_ih"])       # (IN,  HID)
    whh_t = jnp.transpose(params["w_hh"])       # (HID, HID)
    fcw_t = jnp.transpose(params["fc_w"])       # (HID, OUT)
    fc_b = params["fc_b"].reshape(1, OUTPUT_DIM)

    vmem = pl.BlockSpec(memory_space=pltpu.MemorySpace.VMEM)
    smem = pl.BlockSpec(memory_space=pltpu.MemorySpace.SMEM)

    out = pl.pallas_call(
        _rnn_kernel,
        out_shape=jax.ShapeDtypeStruct((1, OUTPUT_DIM), jnp.float32),
        in_specs=[smem, vmem, vmem, vmem, vmem, vmem],
        out_specs=vmem,
    )(x, wih_t, whh_t, b, fcw_t, fc_b)

    return out[0]                               # squeeze batch dim -> (68,)


def _reference_forward(x, params):
    """Pure-JAX reference mirroring torch.nn.RNN + Linear."""
    x = x.astype(jnp.float32)
    w_ih, w_hh = params["w_ih"], params["w_hh"]
    b_ih, b_hh = params["b_ih"], params["b_hh"]
    h = jnp.zeros((HIDDEN,), jnp.float32)
    for t in range(x.shape[0]):
        h = jnp.tanh(x[t] @ w_ih.T + b_ih + h @ w_hh.T + b_hh)
    return h @ params["fc_w"].T + params["fc_b"]


def _init_params(key):
    """Deterministic synthetic weights with PyTorch-style shapes / init range."""
    # TODO(synk): real weights come from torch.load(checkpoint) in init_weights;
    # synthetic deterministic weights are used here instead.
    ks = jax.random.split(key, 6)
    k_rnn = 1.0 / jnp.sqrt(HIDDEN)
    u = lambda k, shape, bound: jax.random.uniform(
        k, shape, jnp.float32, -bound, bound)
    return {
        "w_ih": u(ks[0], (HIDDEN, INPUT_DIM), k_rnn),
        "w_hh": u(ks[1], (HIDDEN, HIDDEN), k_rnn),
        "b_ih": u(ks[2], (HIDDEN,), k_rnn),
        "b_hh": u(ks[3], (HIDDEN,), k_rnn),
        "fc_w": u(ks[4], (OUTPUT_DIM, HIDDEN), k_rnn),
        "fc_b": u(ks[5], (OUTPUT_DIM,), k_rnn),
    }


if __name__ == "__main__":
    key = jax.random.PRNGKey(0)
    k_param, k_x = jax.random.split(key)

    params = _init_params(k_param)
    seq = 8
    x = jax.random.normal(k_x, (seq, INPUT_DIM), jnp.float32)  # (seq, 2) input

    out = fm_depth_rnn_forward(x, params)
    out = jax.block_until_ready(out)
    assert out.shape == (OUTPUT_DIM,), out.shape

    ref = _reference_forward(x, params)
    assert jnp.allclose(out, ref, atol=1e-4, rtol=1e-4), (
        f"max abs err {jnp.max(jnp.abs(out - ref))}")

    print("KERNEL_OK")
</pallas_src>

<mosaic_0001>
module attributes {stable_mosaic.version = 11 : i64} {
  func.func @_rnn_kernel(%arg0: memref<8x2xf32, #tpu.memory_space<smem>>, %arg1: memref<2x136xf32, #tpu.memory_space<vmem>>, %arg2: memref<136x136xf32, #tpu.memory_space<vmem>>, %arg3: memref<1x136xf32, #tpu.memory_space<vmem>>, %arg4: memref<136x68xf32, #tpu.memory_space<vmem>>, %arg5: memref<1x68xf32, #tpu.memory_space<vmem>>, %arg6: memref<1x68xf32, #tpu.memory_space<vmem>>) attributes {dimension_semantics = [], scalar_prefetch = 0 : i64, scratch_operands = 0 : i64, tpu.core_type = #tpu.core_type<tc>} {
    %c0 = arith.constant 0 : index
    %c0_0 = arith.constant 0 : index
    %0 = vector.load %arg1[%c0, %c0_0] : memref<2x136xf32, #tpu.memory_space<vmem>>, vector<1x136xf32>
    %c1 = arith.constant 1 : index
    %c0_1 = arith.constant 0 : index
    %1 = vector.load %arg1[%c1, %c0_1] : memref<2x136xf32, #tpu.memory_space<vmem>>, vector<1x136xf32>
    %c0_2 = arith.constant 0 : index
    %c0_3 = arith.constant 0 : index
    %2 = vector.load %arg3[%c0_2, %c0_3] : memref<1x136xf32, #tpu.memory_space<vmem>>, vector<1x136xf32>
    %cst = arith.constant 0.000000e+00 : f32
    %3 = vector.broadcast %cst : f32 to vector<1x136xf32>
    %c0_i32 = arith.constant 0 : i32
    %4 = arith.index_cast %c0_i32 : i32 to index
    %c0_4 = arith.constant 0 : index
    %5 = memref.load %arg0[%4, %c0_4] : memref<8x2xf32, #tpu.memory_space<smem>>
    %6 = arith.index_cast %c0_i32 : i32 to index
    %c1_5 = arith.constant 1 : index
    %7 = memref.load %arg0[%6, %c1_5] : memref<8x2xf32, #tpu.memory_space<smem>>
    %c0_6 = arith.constant 0 : index
    %c0_7 = arith.constant 0 : index
    %8 = vector.load %arg2[%c0_6, %c0_7] : memref<136x136xf32, #tpu.memory_space<vmem>>, vector<136x136xf32>
    %cst_8 = arith.constant dense<0.000000e+00> : vector<1x136xf32>
    %9 = tpu.matmul %3, %8, %cst_8 {dimension_numbers = #tpu.dot_dimension_numbers<[1], [0], [0], [1], [0, 0, 1, 1], [], []>} : vector<1x136xf32>, vector<136x136xf32>, vector<1x136xf32> -> vector<1x136xf32>
    %10 = vector.broadcast %5 : f32 to vector<1x136xf32>
    %11 = arith.mulf %10, %0 : vector<1x136xf32>
    %12 = arith.addf %2, %11 : vector<1x136xf32>
    %13 = vector.broadcast %7 : f32 to vector<1x136xf32>
    %14 = arith.mulf %13, %1 : vector<1x136xf32>
    %15 = arith.addf %12, %14 : vector<1x136xf32>
    %16 = arith.addf %15, %9 : vector<1x136xf32>
    %17 = math.tanh %16 : vector<1x136xf32>
    %c1_i32 = arith.constant 1 : i32
    %18 = arith.index_cast %c1_i32 : i32 to index
    %c0_9 = arith.constant 0 : index
    %19 = memref.load %arg0[%18, %c0_9] : memref<8x2xf32, #tpu.memory_space<smem>>
    %20 = arith.index_cast %c1_i32 : i32 to index
    %c1_10 = arith.constant 1 : index
    %21 = memref.load %arg0[%20, %c1_10] : memref<8x2xf32, #tpu.memory_space<smem>>
    %c0_11 = arith.constant 0 : index
    %c0_12 = arith.constant 0 : index
    %22 = vector.load %arg2[%c0_11, %c0_12] : memref<136x136xf32, #tpu.memory_space<vmem>>, vector<136x136xf32>
    %cst_13 = arith.constant dense<0.000000e+00> : vector<1x136xf32>
    %23 = tpu.matmul %17, %22, %cst_13 {dimension_numbers = #tpu.dot_dimension_numbers<[1], [0], [0], [1], [0, 0, 1, 1], [], []>} : vector<1x136xf32>, vector<136x136xf32>, vector<1x136xf32> -> vector<1x136xf32>
    %24 = vector.broadcast %19 : f32 to vector<1x136xf32>
    %25 = arith.mulf %24, %0 : vector<1x136xf32>
    %26 = arith.addf %2, %25 : vector<1x136xf32>
    %27 = vector.broadcast %21 : f32 to vector<1x136xf32>
    %28 = arith.mulf %27, %1 : vector<1x136xf32>
    %29 = arith.addf %26, %28 : vector<1x136xf32>
    %30 = arith.addf %29, %23 : vector<1x136xf32>
    %31 = math.tanh %30 : vector<1x136xf32>
    %c2_i32 = arith.constant 2 : i32
    %32 = arith.index_cast %c2_i32 : i32 to index
    %c0_14 = arith.constant 0 : index
    %33 = memref.load %arg0[%32, %c0_14] : memref<8x2xf32, #tpu.memory_space<smem>>
    %34 = arith.index_cast %c2_i32 : i32 to index
    %c1_15 = arith.constant 1 : index
    %35 = memref.load %arg0[%34, %c1_15] : memref<8x2xf32, #tpu.memory_space<smem>>
    %c0_16 = arith.constant 0 : index
    %c0_17 = arith.constant 0 : index
    %36 = vector.load %arg2[%c0_16, %c0_17] : memref<136x136xf32, #tpu.memory_space<vmem>>, vector<136x136xf32>
    %cst_18 = arith.constant dense<0.000000e+00> : vector<1x136xf32>
    %37 = tpu.matmul %31, %36, %cst_18 {dimension_numbers = #tpu.dot_dimension_numbers<[1], [0], [0], [1], [0, 0, 1, 1], [], []>} : vector<1x136xf32>, vector<136x136xf32>, vector<1x136xf32> -> vector<1x136xf32>
    %38 = vector.broadcast %33 : f32 to vector<1x136xf32>
    %39 = arith.mulf %38, %0 : vector<1x136xf32>
    %40 = arith.addf %2, %39 : vector<1x136xf32>
    %41 = vector.broadcast %35 : f32 to vector<1x136xf32>
    %42 = arith.mulf %41, %1 : vector<1x136xf32>
    %43 = arith.addf %40, %42 : vector<1x136xf32>
    %44 = arith.addf %43, %37 : vector<1x136xf32>
    %45 = math.tanh %44 : vector<1x136xf32>
    %c3_i32 = arith.constant 3 : i32
    %46 = arith.index_cast %c3_i32 : i32 to index
    %c0_19 = arith.constant 0 : index
    %47 = memref.load %arg0[%46, %c0_19] : memref<8x2xf32, #tpu.memory_space<smem>>
    %48 = arith.index_cast %c3_i32 : i32 to index
    %c1_20 = arith.constant 1 : index
    %49 = memref.load %arg0[%48, %c1_20] : memref<8x2xf32, #tpu.memory_space<smem>>
    %c0_21 = arith.constant 0 : index
    %c0_22 = arith.constant 0 : index
    %50 = vector.load %arg2[%c0_21, %c0_22] : memref<136x136xf32, #tpu.memory_space<vmem>>, vector<136x136xf32>
    %cst_23 = arith.constant dense<0.000000e+00> : vector<1x136xf32>
    %51 = tpu.matmul %45, %50, %cst_23 {dimension_numbers = #tpu.dot_dimension_numbers<[1], [0], [0], [1], [0, 0, 1, 1], [], []>} : vector<1x136xf32>, vector<136x136xf32>, vector<1x136xf32> -> vector<1x136xf32>
    %52 = vector.broadcast %47 : f32 to vector<1x136xf32>
    %53 = arith.mulf %52, %0 : vector<1x136xf32>
    %54 = arith.addf %2, %53 : vector<1x136xf32>
    %55 = vector.broadcast %49 : f32 to vector<1x136xf32>
    %56 = arith.mulf %55, %1 : vector<1x136xf32>
    %57 = arith.addf %54, %56 : vector<1x136xf32>
    %58 = arith.addf %57, %51 : vector<1x136xf32>
    %59 = math.tanh %58 : vector<1x136xf32>
    %c4_i32 = arith.constant 4 : i32
    %60 = arith.index_cast %c4_i32 : i32 to index
    %c0_24 = arith.constant 0 : index
    %61 = memref.load %arg0[%60, %c0_24] : memref<8x2xf32, #tpu.memory_space<smem>>
    %62 = arith.index_cast %c4_i32 : i32 to index
    %c1_25 = arith.constant 1 : index
    %63 = memref.load %arg0[%62, %c1_25] : memref<8x2xf32, #tpu.memory_space<smem>>
    %c0_26 = arith.constant 0 : index
    %c0_27 = arith.constant 0 : index
    %64 = vector.load %arg2[%c0_26, %c0_27] : memref<136x136xf32, #tpu.memory_space<vmem>>, vector<136x136xf32>
    %cst_28 = arith.constant dense<0.000000e+00> : vector<1x136xf32>
    %65 = tpu.matmul %59, %64, %cst_28 {dimension_numbers = #tpu.dot_dimension_numbers<[1], [0], [0], [1], [0, 0, 1, 1], [], []>} : vector<1x136xf32>, vector<136x136xf32>, vector<1x136xf32> -> vector<1x136xf32>
    %66 = vector.broadcast %61 : f32 to vector<1x136xf32>
    %67 = arith.mulf %66, %0 : vector<1x136xf32>
    %68 = arith.addf %2, %67 : vector<1x136xf32>
    %69 = vector.broadcast %63 : f32 to vector<1x136xf32>
    %70 = arith.mulf %69, %1 : vector<1x136xf32>
    %71 = arith.addf %68, %70 : vector<1x136xf32>
    %72 = arith.addf %71, %65 : vector<1x136xf32>
    %73 = math.tanh %72 : vector<1x136xf32>
    %c5_i32 = arith.constant 5 : i32
    %74 = arith.index_cast %c5_i32 : i32 to index
    %c0_29 = arith.constant 0 : index
    %75 = memref.load %arg0[%74, %c0_29] : memref<8x2xf32, #tpu.memory_space<smem>>
    %76 = arith.index_cast %c5_i32 : i32 to index
    %c1_30 = arith.constant 1 : index
    %77 = memref.load %arg0[%76, %c1_30] : memref<8x2xf32, #tpu.memory_space<smem>>
    %c0_31 = arith.constant 0 : index
    %c0_32 = arith.constant 0 : index
    %78 = vector.load %arg2[%c0_31, %c0_32] : memref<136x136xf32, #tpu.memory_space<vmem>>, vector<136x136xf32>
    %cst_33 = arith.constant dense<0.000000e+00> : vector<1x136xf32>
    %79 = tpu.matmul %73, %78, %cst_33 {dimension_numbers = #tpu.dot_dimension_numbers<[1], [0], [0], [1], [0, 0, 1, 1], [], []>} : vector<1x136xf32>, vector<136x136xf32>, vector<1x136xf32> -> vector<1x136xf32>
    %80 = vector.broadcast %75 : f32 to vector<1x136xf32>
    %81 = arith.mulf %80, %0 : vector<1x136xf32>
    %82 = arith.addf %2, %81 : vector<1x136xf32>
    %83 = vector.broadcast %77 : f32 to vector<1x136xf32>
    %84 = arith.mulf %83, %1 : vector<1x136xf32>
    %85 = arith.addf %82, %84 : vector<1x136xf32>
    %86 = arith.addf %85, %79 : vector<1x136xf32>
    %87 = math.tanh %86 : vector<1x136xf32>
    %c6_i32 = arith.constant 6 : i32
    %88 = arith.index_cast %c6_i32 : i32 to index
    %c0_34 = arith.constant 0 : index
    %89 = memref.load %arg0[%88, %c0_34] : memref<8x2xf32, #tpu.memory_space<smem>>
    %90 = arith.index_cast %c6_i32 : i32 to index
    %c1_35 = arith.constant 1 : index
    %91 = memref.load %arg0[%90, %c1_35] : memref<8x2xf32, #tpu.memory_space<smem>>
    %c0_36 = arith.constant 0 : index
    %c0_37 = arith.constant 0 : index
    %92 = vector.load %arg2[%c0_36, %c0_37] : memref<136x136xf32, #tpu.memory_space<vmem>>, vector<136x136xf32>
    %cst_38 = arith.constant dense<0.000000e+00> : vector<1x136xf32>
    %93 = tpu.matmul %87, %92, %cst_38 {dimension_numbers = #tpu.dot_dimension_numbers<[1], [0], [0], [1], [0, 0, 1, 1], [], []>} : vector<1x136xf32>, vector<136x136xf32>, vector<1x136xf32> -> vector<1x136xf32>
    %94 = vector.broadcast %89 : f32 to vector<1x136xf32>
    %95 = arith.mulf %94, %0 : vector<1x136xf32>
    %96 = arith.addf %2, %95 : vector<1x136xf32>
    %97 = vector.broadcast %91 : f32 to vector<1x136xf32>
    %98 = arith.mulf %97, %1 : vector<1x136xf32>
    %99 = arith.addf %96, %98 : vector<1x136xf32>
    %100 = arith.addf %99, %93 : vector<1x136xf32>
    %101 = math.tanh %100 : vector<1x136xf32>
    %c7_i32 = arith.constant 7 : i32
    %102 = arith.index_cast %c7_i32 : i32 to index
    %c0_39 = arith.constant 0 : index
    %103 = memref.load %arg0[%102, %c0_39] : memref<8x2xf32, #tpu.memory_space<smem>>
    %104 = arith.index_cast %c7_i32 : i32 to index
    %c1_40 = arith.constant 1 : index
    %105 = memref.load %arg0[%104, %c1_40] : memref<8x2xf32, #tpu.memory_space<smem>>
    %c0_41 = arith.constant 0 : index
    %c0_42 = arith.constant 0 : index
    %106 = vector.load %arg2[%c0_41, %c0_42] : memref<136x136xf32, #tpu.memory_space<vmem>>, vector<136x136xf32>
    %cst_43 = arith.constant dense<0.000000e+00> : vector<1x136xf32>
    %107 = tpu.matmul %101, %106, %cst_43 {dimension_numbers = #tpu.dot_dimension_numbers<[1], [0], [0], [1], [0, 0, 1, 1], [], []>} : vector<1x136xf32>, vector<136x136xf32>, vector<1x136xf32> -> vector<1x136xf32>
    %108 = vector.broadcast %103 : f32 to vector<1x136xf32>
    %109 = arith.mulf %108, %0 : vector<1x136xf32>
    %110 = arith.addf %2, %109 : vector<1x136xf32>
    %111 = vector.broadcast %105 : f32 to vector<1x136xf32>
    %112 = arith.mulf %111, %1 : vector<1x136xf32>
    %113 = arith.addf %110, %112 : vector<1x136xf32>
    %114 = arith.addf %113, %107 : vector<1x136xf32>
    %115 = math.tanh %114 : vector<1x136xf32>
    %c8_i32 = arith.constant 8 : i32
    %c0_44 = arith.constant 0 : index
    %c0_45 = arith.constant 0 : index
    %116 = vector.load %arg4[%c0_44, %c0_45] : memref<136x68xf32, #tpu.memory_space<vmem>>, vector<136x68xf32>
    %cst_46 = arith.constant dense<0.000000e+00> : vector<1x68xf32>
    %117 = tpu.matmul %115, %116, %cst_46 {dimension_numbers = #tpu.dot_dimension_numbers<[1], [0], [0], [1], [0, 0, 1, 1], [], []>} : vector<1x136xf32>, vector<136x68xf32>, vector<1x68xf32> -> vector<1x68xf32>
    %c0_47 = arith.constant 0 : index
    %c0_48 = arith.constant 0 : index
    %118 = vector.load %arg5[%c0_47, %c0_48] : memref<1x68xf32, #tpu.memory_space<vmem>>, vector<1x68xf32>
    %119 = arith.addf %117, %118 : vector<1x68xf32>
    %c0_49 = arith.constant 0 : index
    %c0_50 = arith.constant 0 : index
    %120 = vector.load %arg6[%c0_49, %c0_50] : memref<1x68xf32, #tpu.memory_space<vmem>>, vector<1x68xf32>
    tpu.vector_store %arg6[%c0_49, %c0_50], %119 {strides = array<i32>} : memref<1x68xf32, #tpu.memory_space<vmem>>, vector<1x68xf32>,
    return
  }
}

</mosaic_0001>

<llo_original>
// kernel: tpu_custom_call.1
$region0: #{tpu_custom_call.1}
  #allocation0 [shape = 'u32[]', space=smem, size = 0x4, offset = 0x4, fixed_abs, tag = 'smem constant byte address 0x4 - core index']
  #allocation1 [shape = 'u32[144,128]{1,0:T(1,128)}', space=vmem, size = 0x12000, scoped, tag = 'internal scratch']
  %s0 = inlined_call_operand.vmem [shape: f32[8,2], index: 0, kind: input, shape index: {}]
  %s1 = inlined_call_operand.vmem [shape: f32[2,136], index: 1, kind: input, shape index: {}]
  %s2 = inlined_call_operand.hbm [shape: f32[136,136], index: 2, kind: input, shape index: {}]
  %s3 = inlined_call_operand.vmem [shape: f32[1,136], index: 3, kind: input, shape index: {}]
  %s4 = inlined_call_operand.hbm [shape: f32[136,68], index: 4, kind: input, shape index: {}]
  %s5 = inlined_call_operand.vmem [shape: f32[1,68], index: 5, kind: input, shape index: {}]
  %s6 = inlined_call_operand.hbm [shape: f32[1,68], index: 6, kind: output, shape index: {}]
  %s7 = sld [smem:[#allocation0]]
  $region46: #{tpu_custom_call.1} parent=0
    _
  %s9 = ssub.s32 1, %s7
  %s10 = scalar_select 0, %s9, %s7
  $region1: #{tpu_custom_call.1} parent=0
    #allocation2 [shape = 'u8[4096]{0}', space=smem, size = 0x1000, scoped, tag = 'input window, operand 0, single buffered']
    #allocation3 [shape = 's32[1]{0}', space=sflag, size = 0x4, scoped, tag = 'scoped memory for tpu_custom_call.1']
    #allocation4 [shape = 's32[1]{0}', space=sflag, size = 0x4, scoped, tag = 'scoped memory for tpu_custom_call.1']
    #allocation5 [shape = 's32[1]{0}', space=sflag, size = 0x4, scoped, tag = 'scoped memory for tpu_custom_call.1']
    #allocation6 [shape = 'u8[139264]{0}', space=vmem, size = 0x22000, scoped, tag = 'input window, operand 2, single buffered']
    #allocation7 [shape = 'u8[69632]{0}', space=vmem, size = 0x11000, scoped, tag = 'input window, operand 4, single buffered']
    #allocation8 [shape = 's32[1]{0}', space=sflag, size = 0x4, scoped, tag = 'scoped memory for tpu_custom_call.1']
    #allocation9 [shape = 'u8[512]{0}', space=vmem, size = 0x400, scoped, tag = 'output window, operand 0, single buffered']
    %11 = vsyncpa [#allocation5], 0
    %12 = vsyncpa [#allocation3], 0
    %13 = vsyncpa [#allocation8], 0
    %14 = vsyncpa [#allocation4], 0
    // Predicated region
    $region2: #{tpu_custom_call.1} parent=1 // pred_check
      _
    $region3: #{tpu_custom_call.1} parent=1 // pred_check_branch
      %16 = sbr.rel (0) target = $region5
    $region4: #{tpu_custom_call.1} parent=1 // pred_region
      %s18 = ssub.s32 128, 128
      %19 = vsyncadd [#allocation5], %s18
      %s21 = sshll.u32 %s0, 4
      %s22 = int_to_ptr.vmem [resolvable:$true] %s21
      %24 = dma.vmem_to_smem %s22, 128, [#allocation2], [#allocation5]
    $region5: #{tpu_custom_call.1} parent=1 // pred_fallthru
      _
    // Predicated region
    $region6: #{tpu_custom_call.1} parent=1 // pred_check
      _
    $region7: #{tpu_custom_call.1} parent=1 // pred_check_branch
      %26 = sbr.rel (0) target = $region9
    $region8: #{tpu_custom_call.1} parent=1 // pred_region
      _
    $region9: #{tpu_custom_call.1} parent=1 // pred_fallthru
      _
    // Predicated region
    $region10: #{tpu_custom_call.1} parent=1 // pred_check
      _
    $region11: #{tpu_custom_call.1} parent=1 // pred_check_branch
      %28 = sbr.rel (0) target = $region13
    $region12: #{tpu_custom_call.1} parent=1 // pred_region
      %s30 = ssub.s32 4352, 4352
      %31 = vsyncadd [#allocation3], %s30
      %s32 = sshll.u32 [#allocation6], 4
      %s33 = int_to_ptr.vmem [resolvable:$true] %s32
      %38 = dma.hbm_to_vmem [thread:$0]  %s2, 4352, %s33, [#allocation3], 256, 256, 16
    $region13: #{tpu_custom_call.1} parent=1 // pred_fallthru
      _
    // Predicated region
    $region14: #{tpu_custom_call.1} parent=1 // pred_check
      _
    $region15: #{tpu_custom_call.1} parent=1 // pred_check_branch
      %40 = sbr.rel (0) target = $region17
    $region16: #{tpu_custom_call.1} parent=1 // pred_region
      _
    $region17: #{tpu_custom_call.1} parent=1 // pred_fallthru
      _
    // Predicated region
    $region18: #{tpu_custom_call.1} parent=1 // pred_check
      _
    $region19: #{tpu_custom_call.1} parent=1 // pred_check_branch
      %42 = sbr.rel (0) target = $region21
    $region20: #{tpu_custom_call.1} parent=1 // pred_region
      %s44 = ssub.s32 2176, 2176
      %45 = vsyncadd [#allocation8], %s44
      %s46 = sshll.u32 [#allocation7], 4
      %s47 = int_to_ptr.vmem [resolvable:$true] %s46
      %52 = dma.hbm_to_vmem [thread:$0]  %s4, 2176, %s47, [#allocation8], 128, 128, 8
    $region21: #{tpu_custom_call.1} parent=1 // pred_fallthru
      _
    // Predicated region
    $region22: #{tpu_custom_call.1} parent=1 // pred_check
      _
    $region23: #{tpu_custom_call.1} parent=1 // pred_check_branch
      %54 = sbr.rel (0) target = $region25
    $region24: #{tpu_custom_call.1} parent=1 // pred_region
      _
    $region25: #{tpu_custom_call.1} parent=1 // pred_fallthru
      _
    // Predicated region
    $region26: #{tpu_custom_call.1} parent=1 // pred_check
      _
    $region27: #{tpu_custom_call.1} parent=1 // pred_check_branch
      %56 = sbr.rel (0) target = $region29
    $region28: #{tpu_custom_call.1} parent=1 // pred_region
      %57 = dma.done [#allocation5], 128
    $region29: #{tpu_custom_call.1} parent=1 // pred_fallthru
      _
    // Predicated region
    $region30: #{tpu_custom_call.1} parent=1 // pred_check
      _
    $region31: #{tpu_custom_call.1} parent=1 // pred_check_branch
      %59 = sbr.rel (0) target = $region33
    $region32: #{tpu_custom_call.1} parent=1 // pred_region
      %60 = dma.done [#allocation3], 4352
    $region33: #{tpu_custom_call.1} parent=1 // pred_fallthru
      _
    // Predicated region
    $region34: #{tpu_custom_call.1} parent=1 // pred_check
      _
    $region35: #{tpu_custom_call.1} parent=1 // pred_check_branch
      %62 = sbr.rel (0) target = $region37
    $region36: #{tpu_custom_call.1} parent=1 // pred_region
      %63 = dma.done [#allocation8], 2176
    $region37: #{tpu_custom_call.1} parent=1 // pred_fallthru
      _
    %64 = sfence
    %v65 = vld [vmem:[%s1] ss:$2 sm:$0x3]
    %s66 = scalar_lea.vmem %s1, 1
    %v67 = vld [vmem:[%s66] ss:$2 sm:$0x3]
    %v68 = vld [vmem:[%s3] sm:$0x3]
    %s69 = sld [smem:[#allocation2]]
    %s70 = sld [smem:[#allocation2 + $0x1]]
    %v71 = vld [vmem:[#allocation6] sm:$0xff]
    %v72 = vld [vmem:[#allocation6 + $0x8] sm:$0xff]
    %v73 = vld [vmem:[#allocation6 + $0x10] sm:$0xff]
    %v74 = vld [vmem:[#allocation6 + $0x18] sm:$0xff]
    %v75 = vld [vmem:[#allocation6 + $0x20] sm:$0xff]
    %v76 = vld [vmem:[#allocation6 + $0x28] sm:$0xff]
    %v77 = vld [vmem:[#allocation6 + $0x30] sm:$0xff]
    %v78 = vld [vmem:[#allocation6 + $0x38] sm:$0xff]
    %v79 = vld [vmem:[#allocation6 + $0x40] sm:$0xff]
    %v80 = vld [vmem:[#allocation6 + $0x48] sm:$0xff]
    %v81 = vld [vmem:[#allocation6 + $0x50] sm:$0xff]
    %v82 = vld [vmem:[#allocation6 + $0x58] sm:$0xff]
    %v83 = vld [vmem:[#allocation6 + $0x60] sm:$0xff]
    %v84 = vld [vmem:[#allocation6 + $0x68] sm:$0xff]
    %v85 = vld [vmem:[#allocation6 + $0x70] sm:$0xff]
    %v86 = vld [vmem:[#allocation6 + $0x78] sm:$0xff]
    %v87 = vld [vmem:[#allocation6 + $0x80] sm:$0xff]
    %v88 = vld [vmem:[#allocation6 + $0x88] sm:$0xff]
    %v89 = vld [vmem:[#allocation6 + $0x90] sm:$0xff]
    %v90 = vld [vmem:[#allocation6 + $0x98] sm:$0xff]
    %v91 = vld [vmem:[#allocation6 + $0xa0] sm:$0xff]
    %v92 = vld [vmem:[#allocation6 + $0xa8] sm:$0xff]
    %v93 = vld [vmem:[#allocation6 + $0xb0] sm:$0xff]
    %v94 = vld [vmem:[#allocation6 + $0xb8] sm:$0xff]
    %v95 = vld [vmem:[#allocation6 + $0xc0] sm:$0xff]
    %v96 = vld [vmem:[#allocation6 + $0xc8] sm:$0xff]
    %v97 = vld [vmem:[#allocation6 + $0xd0] sm:$0xff]
    %v98 = vld [vmem:[#allocation6 + $0xd8] sm:$0xff]
    %v99 = vld [vmem:[#allocation6 + $0xe0] sm:$0xff]
    %v100 = vld [vmem:[#allocation6 + $0xe8] sm:$0xff]
    %v101 = vld [vmem:[#allocation6 + $0xf0] sm:$0xff]
    %v102 = vld [vmem:[#allocation6 + $0xf8] sm:$0xff]
    %v103 = vld [vmem:[#allocation6 + $0x100] sm:$0xff]
    %v104 = vld [vmem:[#allocation6 + $0x108] sm:$0xff]
    %vm105 = vcmask 64512
    %v107 = vsel %vm105, 0.0, 0
    %109 = vmatprep.subr.mxu0 %v72
    %110 = vmatpush1.msra.mxu0 %v71
    %111 = vmatprep.subr.mxu0 %v74
    %112 = vmatpush1.msra.mxu0 %v73
    %113 = vmatprep.subr.mxu0 %v76
    %114 = vmatpush1.msra.mxu0 %v75
    %115 = vmatprep.subr.mxu0 %v78
    %116 = vmatpush1.msra.mxu0 %v77
    %117 = vmatprep.subr.mxu0 %v80
    %118 = vmatpush1.msra.mxu0 %v79
    %119 = vmatprep.subr.mxu0 %v82
    %120 = vmatpush1.msra.mxu0 %v81
    %121 = vmatprep.subr.mxu0 %v84
    %122 = vmatpush1.msra.mxu0 %v83
    %123 = vmatprep.subr.mxu0 %v86
    %124 = vmatpush1.msra.mxu0 %v85
    %125 = vmatprep.subr.mxu0 %v88
    %126 = vmatpush1.msra.mxu0 %v87
    %127 = vmatprep.subr.mxu0 %v90
    %128 = vmatpush1.msra.mxu0 %v89
    %129 = vmatprep.subr.mxu0 %v92
    %130 = vmatpush1.msra.mxu0 %v91
    %131 = vmatprep.subr.mxu0 %v94
    %132 = vmatpush1.msra.mxu0 %v93
    %133 = vmatprep.subr.mxu0 %v96
    %134 = vmatpush1.msra.mxu0 %v95
    %135 = vmatprep.subr.mxu0 %v98
    %136 = vmatpush1.msra.mxu0 %v97
    %137 = vmatprep.subr.mxu0 %v100
    %138 = vmatpush1.msra.mxu0 %v99
    %139 = vmatprep.subr.mxu0 %v102
    %140 = vmatpush1.msra.mxu0 %v101
    %141 = vmatprep.subr.mxu0 %v104
    %142 = vmatpush1.msra.mxu0 %v103
    %143 = vmatprep.subr.mxu0 0.0
    %144 = vmatpush1.msra.mxu0 0.0
    %145 = vmatprep.subr.mxu0 0.0
    %146 = vmatpush1.msra.mxu0 0.0
    %147 = vmatprep.subr.mxu0 0.0
    %148 = vmatpush1.msra.mxu0 0.0
    %149 = vmatprep.subr.mxu0 0.0
    %150 = vmatpush1.msra.mxu0 0.0
    %151 = vmatprep.subr.mxu0 0.0
    %152 = vmatpush1.msra.mxu0 0.0
    %153 = vmatprep.subr.mxu0 0.0
    %154 = vmatpush1.msra.mxu0 0.0
    %155 = vmatprep.subr.mxu0 0.0
    %156 = vmatpush1.msra.mxu0 0.0
    %157 = vmatprep.subr.mxu0 0.0
    %158 = vmatpush1.msra.mxu0 0.0
    %159 = vmatprep.subr.mxu0 0.0
    %160 = vmatpush1.msra.mxu0 0.0
    %161 = vmatprep.subr.mxu0 0.0
    %162 = vmatpush1.msra.mxu0 0.0
    %163 = vmatprep.subr.mxu0 0.0
    %164 = vmatpush1.msra.mxu0 0.0
    %165 = vmatprep.subr.mxu0 0.0
    %166 = vmatpush1.msra.mxu0 0.0
    %167 = vmatprep.subr.mxu0 0.0
    %168 = vmatpush1.msra.mxu0 0.0
    %169 = vmatprep.subr.mxu0 0.0
    %170 = vmatpush1.msra.mxu0 0.0
    %171 = vmatprep.subr.mxu0 0.0
    %172 = vmatpush1.msra.mxu0 0.0
    %173 = vmatprep.mubr.f32.mxu0 %v107
    %174 = vmatmul.mubr.f32.gmra.mrb[0].mxu0 0.0
    %v175 = vpop.f32.mrb[0].mxu0
    %v176 = vadd.f32 0.0, %v175
    %v177 = vpop.f32.mrb[0].mxu0
    %v178 = vadd.f32 0.0, %v177
    %179 = vdwg.mxu0
    %v180 = vstv %s69
    %v181 = vmul.f32 %v180, %v65
    %v182 = vadd.f32 %v68, %v181
    %v183 = vstv %s70
    %v184 = vmul.f32 %v183, %v67
    %v185 = vadd.f32 %v182, %v184
    %v188 = vcombine.low %v176, %v178
    %v190 = vunpack.c.l.s4 1966171168
    %v191 = vunpack.c.0.s8 %v190
    %v192 = vlaneseq
    %v193 = vshrl.u32 %v192, 7
    %v194 = vsub.s32 %v191, %v193
    %v195 = vrot.slane %v188, %v194
    %v197 = vunpack.c.l.s4 1966171168
    %v198 = vunpack.c.0.s8 %v197
    %v199 = vlaneseq
    %v200 = vshrl.u32 %v199, 7
    %v201 = vsub.s32 %v198, %v200
    %v202 = vrot.slane %v195, %v201
    %v204 = vadd.f32 %v185, %v202
    %v205 = vtanh.pop %v204
    %s206 = sld [smem:[#allocation2 + $0x80]]
    %s207 = sld [smem:[#allocation2 + $0x81]]
    %v209 = vlaneseq
    %v210 = vshrl.u32 %v209, 7
    %v211 = vsub.s32 0, %v210
    %v212 = vrot.slane %v205, %v211
    %v213 = vlaneseq
    %v214 = vshrl.u32 %v213, 7
    %v215 = vsub.s32 1, %v214
    %v216 = vrot.slane %v205, %v215
    %v218 = vsel %vm105, %v216, 0
    %220 = vmatprep.subr.mxu0 %v72
    %221 = vmatpush1.msra.mxu0 %v71
    %222 = vmatprep.subr.mxu0 %v74
    %223 = vmatpush1.msra.mxu0 %v73
    %224 = vmatprep.subr.mxu0 %v76
    %225 = vmatpush1.msra.mxu0 %v75
    %226 = vmatprep.subr.mxu0 %v78
    %227 = vmatpush1.msra.mxu0 %v77
    %228 = vmatprep.subr.mxu0 %v80
    %229 = vmatpush1.msra.mxu0 %v79
    %230 = vmatprep.subr.mxu0 %v82
    %231 = vmatpush1.msra.mxu0 %v81
    %232 = vmatprep.subr.mxu0 %v84
    %233 = vmatpush1.msra.mxu0 %v83
    %234 = vmatprep.subr.mxu0 %v86
    %235 = vmatpush1.msra.mxu0 %v85
    %236 = vmatprep.subr.mxu0 %v88
    %237 = vmatpush1.msra.mxu0 %v87
    %238 = vmatprep.subr.mxu0 %v90
    %239 = vmatpush1.msra.mxu0 %v89
    %240 = vmatprep.subr.mxu0 %v92
    %241 = vmatpush1.msra.mxu0 %v91
    %242 = vmatprep.subr.mxu0 %v94
    %243 = vmatpush1.msra.mxu0 %v93
    %244 = vmatprep.subr.mxu0 %v96
    %245 = vmatpush1.msra.mxu0 %v95
    %246 = vmatprep.subr.mxu0 %v98
    %247 = vmatpush1.msra.mxu0 %v97
    %248 = vmatprep.subr.mxu0 %v100
    %249 = vmatpush1.msra.mxu0 %v99
    %250 = vmatprep.subr.mxu0 %v102
    %251 = vmatpush1.msra.mxu0 %v101
    %252 = vmatprep.subr.mxu0 %v104
    %253 = vmatpush1.msra.mxu0 %v103
    %254 = vmatprep.subr.mxu0 0.0
    %255 = vmatpush1.msra.mxu0 0.0
    %256 = vmatprep.subr.mxu0 0.0
    %257 = vmatpush1.msra.mxu0 0.0
    %258 = vmatprep.subr.mxu0 0.0
    %259 = vmatpush1.msra.mxu0 0.0
    %260 = vmatprep.subr.mxu0 0.0
    %261 = vmatpush1.msra.mxu0 0.0
    %262 = vmatprep.subr.mxu0 0.0
    %263 = vmatpush1.msra.mxu0 0.0
    %264 = vmatprep.subr.mxu0 0.0
    %265 = vmatpush1.msra.mxu0 0.0
    %266 = vmatprep.subr.mxu0 0.0
    %267 = vmatpush1.msra.mxu0 0.0
    %268 = vmatprep.subr.mxu0 0.0
    %269 = vmatpush1.msra.mxu0 0.0
    %270 = vmatprep.subr.mxu0 0.0
    %271 = vmatpush1.msra.mxu0 0.0
    %272 = vmatprep.subr.mxu0 0.0
    %273 = vmatpush1.msra.mxu0 0.0
    %274 = vmatprep.subr.mxu0 0.0
    %275 = vmatpush1.msra.mxu0 0.0
    %276 = vmatprep.subr.mxu0 0.0
    %277 = vmatpush1.msra.mxu0 0.0
    %278 = vmatprep.subr.mxu0 0.0
    %279 = vmatpush1.msra.mxu0 0.0
    %280 = vmatprep.subr.mxu0 0.0
    %281 = vmatpush1.msra.mxu0 0.0
    %282 = vmatprep.subr.mxu0 0.0
    %283 = vmatpush1.msra.mxu0 0.0
    %284 = vmatprep.mubr.f32.mxu0 %v218
    %285 = vmatmul.mubr.f32.gmra.mrb[0].mxu0 %v212
    %v286 = vpop.f32.mrb[0].mxu0
    %v287 = vadd.f32 0.0, %v286
    %v288 = vpop.f32.mrb[0].mxu0
    %v289 = vadd.f32 0.0, %v288
    %290 = vdwg.mxu0
    %v291 = vstv %s206
    %v292 = vmul.f32 %v291, %v65
    %v293 = vadd.f32 %v68, %v292
    %v294 = vstv %s207
    %v295 = vmul.f32 %v294, %v67
    %v296 = vadd.f32 %v293, %v295
    %v299 = vcombine.low %v287, %v289
    %v301 = vunpack.c.l.s4 1966171168
    %v302 = vunpack.c.0.s8 %v301
    %v303 = vlaneseq
    %v304 = vshrl.u32 %v303, 7
    %v305 = vsub.s32 %v302, %v304
    %v306 = vrot.slane %v299, %v305
    %v308 = vunpack.c.l.s4 1966171168
    %v309 = vunpack.c.0.s8 %v308
    %v310 = vlaneseq
    %v311 = vshrl.u32 %v310, 7
    %v312 = vsub.s32 %v309, %v311
    %v313 = vrot.slane %v306, %v312
    %v315 = vadd.f32 %v296, %v313
    %v316 = vtanh.pop %v315
    %s317 = sld [smem:[#allocation2 + $0x100]]
    %s318 = sld [smem:[#allocation2 + $0x101]]
    %v320 = vlaneseq
    %v321 = vshrl.u32 %v320, 7
    %v322 = vsub.s32 0, %v321
    %v323 = vrot.slane %v316, %v322
    %v324 = vlaneseq
    %v325 = vshrl.u32 %v324, 7
    %v326 = vsub.s32 1, %v325
    %v327 = vrot.slane %v316, %v326
    %v329 = vsel %vm105, %v327, 0
    %331 = vmatprep.subr.mxu0 %v72
    %332 = vmatpush1.msra.mxu0 %v71
    %333 = vmatprep.subr.mxu0 %v74
    %334 = vmatpush1.msra.mxu0 %v73
    %335 = vmatprep.subr.mxu0 %v76
    %336 = vmatpush1.msra.mxu0 %v75
    %337 = vmatprep.subr.mxu0 %v78
    %338 = vmatpush1.msra.mxu0 %v77
    %339 = vmatprep.subr.mxu0 %v80
    %340 = vmatpush1.msra.mxu0 %v79
    %341 = vmatprep.subr.mxu0 %v82
    %342 = vmatpush1.msra.mxu0 %v81
    %343 = vmatprep.subr.mxu0 %v84
    %344 = vmatpush1.msra.mxu0 %v83
    %345 = vmatprep.subr.mxu0 %v86
    %346 = vmatpush1.msra.mxu0 %v85
    %347 = vmatprep.subr.mxu0 %v88
    %348 = vmatpush1.msra.mxu0 %v87
    %349 = vmatprep.subr.mxu0 %v90
    %350 = vmatpush1.msra.mxu0 %v89
    %351 = vmatprep.subr.mxu0 %v92
    %352 = vmatpush1.msra.mxu0 %v91
    %353 = vmatprep.subr.mxu0 %v94
    %354 = vmatpush1.msra.mxu0 %v93
    %355 = vmatprep.subr.mxu0 %v96
    %356 = vmatpush1.msra.mxu0 %v95
    %357 = vmatprep.subr.mxu0 %v98
    %358 = vmatpush1.msra.mxu0 %v97
    %359 = vmatprep.subr.mxu0 %v100
    %360 = vmatpush1.msra.mxu0 %v99
    %361 = vmatprep.subr.mxu0 %v102
    %362 = vmatpush1.msra.mxu0 %v101
    %363 = vmatprep.subr.mxu0 %v104
    %364 = vmatpush1.msra.mxu0 %v103
    %365 = vmatprep.subr.mxu0 0.0
    %366 = vmatpush1.msra.mxu0 0.0
    %367 = vmatprep.subr.mxu0 0.0
    %368 = vmatpush1.msra.mxu0 0.0
    %369 = vmatprep.subr.mxu0 0.0
    %370 = vmatpush1.msra.mxu0 0.0
    %371 = vmatprep.subr.mxu0 0.0
    %372 = vmatpush1.msra.mxu0 0.0
    %373 = vmatprep.subr.mxu0 0.0
    %374 = vmatpush1.msra.mxu0 0.0
    %375 = vmatprep.subr.mxu0 0.0
    %376 = vmatpush1.msra.mxu0 0.0
    %377 = vmatprep.subr.mxu0 0.0
    %378 = vmatpush1.msra.mxu0 0.0
    %379 = vmatprep.subr.mxu0 0.0
    %380 = vmatpush1.msra.mxu0 0.0
    %381 = vmatprep.subr.mxu0 0.0
    %382 = vmatpush1.msra.mxu0 0.0
    %383 = vmatprep.subr.mxu0 0.0
    %384 = vmatpush1.msra.mxu0 0.0
    %385 = vmatprep.subr.mxu0 0.0
    %386 = vmatpush1.msra.mxu0 0.0
    %387 = vmatprep.subr.mxu0 0.0
    %388 = vmatpush1.msra.mxu0 0.0
    %389 = vmatprep.subr.mxu0 0.0
    %390 = vmatpush1.msra.mxu0 0.0
    %391 = vmatprep.subr.mxu0 0.0
    %392 = vmatpush1.msra.mxu0 0.0
    %393 = vmatprep.subr.mxu0 0.0
    %394 = vmatpush1.msra.mxu0 0.0
    %395 = vmatprep.mubr.f32.mxu0 %v329
    %396 = vmatmul.mubr.f32.gmra.mrb[0].mxu0 %v323
    %v397 = vpop.f32.mrb[0].mxu0
    %v398 = vadd.f32 0.0, %v397
    %v399 = vpop.f32.mrb[0].mxu0
    %v400 = vadd.f32 0.0, %v399
    %401 = vdwg.mxu0
    %v402 = vstv %s317
    %v403 = vmul.f32 %v402, %v65
    %v404 = vadd.f32 %v68, %v403
    %v405 = vstv %s318
    %v406 = vmul.f32 %v405, %v67
    %v407 = vadd.f32 %v404, %v406
    %v410 = vcombine.low %v398, %v400
    %v412 = vunpack.c.l.s4 1966171168
    %v413 = vunpack.c.0.s8 %v412
    %v414 = vlaneseq
    %v415 = vshrl.u32 %v414, 7
    %v416 = vsub.s32 %v413, %v415
    %v417 = vrot.slane %v410, %v416
    %v419 = vunpack.c.l.s4 1966171168
    %v420 = vunpack.c.0.s8 %v419
    %v421 = vlaneseq
    %v422 = vshrl.u32 %v421, 7
    %v423 = vsub.s32 %v420, %v422
    %v424 = vrot.slane %v417, %v423
    %v426 = vadd.f32 %v407, %v424
    %v427 = vtanh.pop %v426
    %s428 = sld [smem:[#allocation2 + $0x180]]
    %s429 = sld [smem:[#allocation2 + $0x181]]
    %v431 = vlaneseq
    %v432 = vshrl.u32 %v431, 7
    %v433 = vsub.s32 0, %v432
    %v434 = vrot.slane %v427, %v433
    %v435 = vlaneseq
    %v436 = vshrl.u32 %v435, 7
    %v437 = vsub.s32 1, %v436
    %v438 = vrot.slane %v427, %v437
    %v440 = vsel %vm105, %v438, 0
    %442 = vmatprep.subr.mxu0 %v72
    %443 = vmatpush1.msra.mxu0 %v71
    %444 = vmatprep.subr.mxu0 %v74
    %445 = vmatpush1.msra.mxu0 %v73
    %446 = vmatprep.subr.mxu0 %v76
    %447 = vmatpush1.msra.mxu0 %v75
    %448 = vmatprep.subr.mxu0 %v78
    %449 = vmatpush1.msra.mxu0 %v77
    %450 = vmatprep.subr.mxu0 %v80
    %451 = vmatpush1.msra.mxu0 %v79
    %452 = vmatprep.subr.mxu0 %v82
    %453 = vmatpush1.msra.mxu0 %v81
    %454 = vmatprep.subr.mxu0 %v84
    %455 = vmatpush1.msra.mxu0 %v83
    %456 = vmatprep.subr.mxu0 %v86
    %457 = vmatpush1.msra.mxu0 %v85
    %458 = vmatprep.subr.mxu0 %v88
    %459 = vmatpush1.msra.mxu0 %v87
    %460 = vmatprep.subr.mxu0 %v90
    %461 = vmatpush1.msra.mxu0 %v89
    %462 = vmatprep.subr.mxu0 %v92
    %463 = vmatpush1.msra.mxu0 %v91
    %464 = vmatprep.subr.mxu0 %v94
    %465 = vmatpush1.msra.mxu0 %v93
    %466 = vmatprep.subr.mxu0 %v96
    %467 = vmatpush1.msra.mxu0 %v95
    %468 = vmatprep.subr.mxu0 %v98
    %469 = vmatpush1.msra.mxu0 %v97
    %470 = vmatprep.subr.mxu0 %v100
    %471 = vmatpush1.msra.mxu0 %v99
    %472 = vmatprep.subr.mxu0 %v102
    %473 = vmatpush1.msra.mxu0 %v101
    %474 = vmatprep.subr.mxu0 %v104
    %475 = vmatpush1.msra.mxu0 %v103
    %476 = vmatprep.subr.mxu0 0.0
    %477 = vmatpush1.msra.mxu0 0.0
    %478 = vmatprep.subr.mxu0 0.0
    %479 = vmatpush1.msra.mxu0 0.0
    %480 = vmatprep.subr.mxu0 0.0
    %481 = vmatpush1.msra.mxu0 0.0
    %482 = vmatprep.subr.mxu0 0.0
    %483 = vmatpush1.msra.mxu0 0.0
    %484 = vmatprep.subr.mxu0 0.0
    %485 = vmatpush1.msra.mxu0 0.0
    %486 = vmatprep.subr.mxu0 0.0
    %487 = vmatpush1.msra.mxu0 0.0
    %488 = vmatprep.subr.mxu0 0.0
    %489 = vmatpush1.msra.mxu0 0.0
    %490 = vmatprep.subr.mxu0 0.0
    %491 = vmatpush1.msra.mxu0 0.0
    %492 = vmatprep.subr.mxu0 0.0
    %493 = vmatpush1.msra.mxu0 0.0
    %494 = vmatprep.subr.mxu0 0.0
    %495 = vmatpush1.msra.mxu0 0.0
    %496 = vmatprep.subr.mxu0 0.0
    %497 = vmatpush1.msra.mxu0 0.0
    %498 = vmatprep.subr.mxu0 0.0
    %499 = vmatpush1.msra.mxu0 0.0
    %500 = vmatprep.subr.mxu0 0.0
    %501 = vmatpush1.msra.mxu0 0.0
    %502 = vmatprep.subr.mxu0 0.0
    %503 = vmatpush1.msra.mxu0 0.0
    %504 = vmatprep.subr.mxu0 0.0
    %505 = vmatpush1.msra.mxu0 0.0
    %506 = vmatprep.mubr.f32.mxu0 %v440
    %507 = vmatmul.mubr.f32.gmra.mrb[0].mxu0 %v434
    %v508 = vpop.f32.mrb[0].mxu0
    %v509 = vadd.f32 0.0, %v508
    %v510 = vpop.f32.mrb[0].mxu0
    %v511 = vadd.f32 0.0, %v510
    %512 = vdwg.mxu0
    %v513 = vstv %s428
    %v514 = vmul.f32 %v513, %v65
    %v515 = vadd.f32 %v68, %v514
    %v516 = vstv %s429
    %v517 = vmul.f32 %v516, %v67
    %v518 = vadd.f32 %v515, %v517
    %v521 = vcombine.low %v509, %v511
    %v523 = vunpack.c.l.s4 1966171168
    %v524 = vunpack.c.0.s8 %v523
    %v525 = vlaneseq
    %v526 = vshrl.u32 %v525, 7
    %v527 = vsub.s32 %v524, %v526
    %v528 = vrot.slane %v521, %v527
    %v530 = vunpack.c.l.s4 1966171168
    %v531 = vunpack.c.0.s8 %v530
    %v532 = vlaneseq
    %v533 = vshrl.u32 %v532, 7
    %v534 = vsub.s32 %v531, %v533
    %v535 = vrot.slane %v528, %v534
    %v537 = vadd.f32 %v518, %v535
    %v538 = vtanh.pop %v537
    %s539 = sld [smem:[#allocation2 + $0x200]]
    %s540 = sld [smem:[#allocation2 + $0x201]]
    %v542 = vlaneseq
    %v543 = vshrl.u32 %v542, 7
    %v544 = vsub.s32 0, %v543
    %v545 = vrot.slane %v538, %v544
    %v546 = vlaneseq
    %v547 = vshrl.u32 %v546, 7
    %v548 = vsub.s32 1, %v547
    %v549 = vrot.slane %v538, %v548
    %v551 = vsel %vm105, %v549, 0
    %553 = vmatprep.subr.mxu0 %v72
    %554 = vmatpush1.msra.mxu0 %v71
    %555 = vmatprep.subr.mxu0 %v74
    %556 = vmatpush1.msra.mxu0 %v73
    %557 = vmatprep.subr.mxu0 %v76
    %558 = vmatpush1.msra.mxu0 %v75
    %559 = vmatprep.subr.mxu0 %v78
    %560 = vmatpush1.msra.mxu0 %v77
    %561 = vmatprep.subr.mxu0 %v80
    %562 = vmatpush1.msra.mxu0 %v79
    %563 = vmatprep.subr.mxu0 %v82
    %564 = vmatpush1.msra.mxu0 %v81
    %565 = vmatprep.subr.mxu0 %v84
    %566 = vmatpush1.msra.mxu0 %v83
    %567 = vmatprep.subr.mxu0 %v86
    %568 = vmatpush1.msra.mxu0 %v85
    %569 = vmatprep.subr.mxu0 %v88
    %570 = vmatpush1.msra.mxu0 %v87
    %571 = vmatprep.subr.mxu0 %v90
    %572 = vmatpush1.msra.mxu0 %v89
    %573 = vmatprep.subr.mxu0 %v92
    %574 = vmatpush1.msra.mxu0 %v91
    %575 = vmatprep.subr.mxu0 %v94
    %576 = vmatpush1.msra.mxu0 %v93
    %577 = vmatprep.subr.mxu0 %v96
    %578 = vmatpush1.msra.mxu0 %v95
    %579 = vmatprep.subr.mxu0 %v98
    %580 = vmatpush1.msra.mxu0 %v97
    %581 = vmatprep.subr.mxu0 %v100
    %582 = vmatpush1.msra.mxu0 %v99
    %583 = vmatprep.subr.mxu0 %v102
    %584 = vmatpush1.msra.mxu0 %v101
    %585 = vmatprep.subr.mxu0 %v104
    %586 = vmatpush1.msra.mxu0 %v103
    %587 = vmatprep.subr.mxu0 0.0
    %588 = vmatpush1.msra.mxu0 0.0
    %589 = vmatprep.subr.mxu0 0.0
    %590 = vmatpush1.msra.mxu0 0.0
    %591 = vmatprep.subr.mxu0 0.0
    %592 = vmatpush1.msra.mxu0 0.0
    %593 = vmatprep.subr.mxu0 0.0
    %594 = vmatpush1.msra.mxu0 0.0
    %595 = vmatprep.subr.mxu0 0.0
    %596 = vmatpush1.msra.mxu0 0.0
    %597 = vmatprep.subr.mxu0 0.0
    %598 = vmatpush1.msra.mxu0 0.0
    %599 = vmatprep.subr.mxu0 0.0
    %600 = vmatpush1.msra.mxu0 0.0
    %601 = vmatprep.subr.mxu0 0.0
    %602 = vmatpush1.msra.mxu0 0.0
    %603 = vmatprep.subr.mxu0 0.0
    %604 = vmatpush1.msra.mxu0 0.0
    %605 = vmatprep.subr.mxu0 0.0
    %606 = vmatpush1.msra.mxu0 0.0
    %607 = vmatprep.subr.mxu0 0.0
    %608 = vmatpush1.msra.mxu0 0.0
    %609 = vmatprep.subr.mxu0 0.0
    %610 = vmatpush1.msra.mxu0 0.0
    %611 = vmatprep.subr.mxu0 0.0
    %612 = vmatpush1.msra.mxu0 0.0
    %613 = vmatprep.subr.mxu0 0.0
    %614 = vmatpush1.msra.mxu0 0.0
    %615 = vmatprep.subr.mxu0 0.0
    %616 = vmatpush1.msra.mxu0 0.0
    %617 = vmatprep.mubr.f32.mxu0 %v551
    %618 = vmatmul.mubr.f32.gmra.mrb[0].mxu0 %v545
    %v619 = vpop.f32.mrb[0].mxu0
    %v620 = vadd.f32 0.0, %v619
    %v621 = vpop.f32.mrb[0].mxu0
    %v622 = vadd.f32 0.0, %v621
    %623 = vdwg.mxu0
    %v624 = vstv %s539
    %v625 = vmul.f32 %v624, %v65
    %v626 = vadd.f32 %v68, %v625
    %v627 = vstv %s540
    %v628 = vmul.f32 %v627, %v67
    %v629 = vadd.f32 %v626, %v628
    %v632 = vcombine.low %v620, %v622
    %v634 = vunpack.c.l.s4 1966171168
    %v635 = vunpack.c.0.s8 %v634
    %v636 = vlaneseq
    %v637 = vshrl.u32 %v636, 7
    %v638 = vsub.s32 %v635, %v637
    %v639 = vrot.slane %v632, %v638
    %v641 = vunpack.c.l.s4 1966171168
    %v642 = vunpack.c.0.s8 %v641
    %v643 = vlaneseq
    %v644 = vshrl.u32 %v643, 7
    %v645 = vsub.s32 %v642, %v644
    %v646 = vrot.slane %v639, %v645
    %v648 = vadd.f32 %v629, %v646
    %v649 = vtanh.pop %v648
    %s650 = sld [smem:[#allocation2 + $0x280]]
    %s651 = sld [smem:[#allocation2 + $0x281]]
    %v653 = vlaneseq
    %v654 = vshrl.u32 %v653, 7
    %v655 = vsub.s32 0, %v654
    %v656 = vrot.slane %v649, %v655
    %v657 = vlaneseq
    %v658 = vshrl.u32 %v657, 7
    %v659 = vsub.s32 1, %v658
    %v660 = vrot.slane %v649, %v659
    %v662 = vsel %vm105, %v660, 0
    %664 = vmatprep.subr.mxu0 %v72
    %665 = vmatpush1.msra.mxu0 %v71
    %666 = vmatprep.subr.mxu0 %v74
    %667 = vmatpush1.msra.mxu0 %v73
    %668 = vmatprep.subr.mxu0 %v76
    %669 = vmatpush1.msra.mxu0 %v75
    %670 = vmatprep.subr.mxu0 %v78
    %671 = vmatpush1.msra.mxu0 %v77
    %672 = vmatprep.subr.mxu0 %v80
    %673 = vmatpush1.msra.mxu0 %v79
    %674 = vmatprep.subr.mxu0 %v82
    %675 = vmatpush1.msra.mxu0 %v81
    %676 = vmatprep.subr.mxu0 %v84
    %677 = vmatpush1.msra.mxu0 %v83
    %678 = vmatprep.subr.mxu0 %v86
    %679 = vmatpush1.msra.mxu0 %v85
    %680 = vmatprep.subr.mxu0 %v88
    %681 = vmatpush1.msra.mxu0 %v87
    %682 = vmatprep.subr.mxu0 %v90
    %683 = vmatpush1.msra.mxu0 %v89
    %684 = vmatprep.subr.mxu0 %v92
    %685 = vmatpush1.msra.mxu0 %v91
    %686 = vmatprep.subr.mxu0 %v94
    %687 = vmatpush1.msra.mxu0 %v93
    %688 = vmatprep.subr.mxu0 %v96
    %689 = vmatpush1.msra.mxu0 %v95
    %690 = vmatprep.subr.mxu0 %v98
    %691 = vmatpush1.msra.mxu0 %v97
    %692 = vmatprep.subr.mxu0 %v100
    %693 = vmatpush1.msra.mxu0 %v99
    %694 = vmatprep.subr.mxu0 %v102
    %695 = vmatpush1.msra.mxu0 %v101
    %696 = vmatprep.subr.mxu0 %v104
    %697 = vmatpush1.msra.mxu0 %v103
    %698 = vmatprep.subr.mxu0 0.0
    %699 = vmatpush1.msra.mxu0 0.0
    %700 = vmatprep.subr.mxu0 0.0
    %701 = vmatpush1.msra.mxu0 0.0
    %702 = vmatprep.subr.mxu0 0.0
    %703 = vmatpush1.msra.mxu0 0.0
    %704 = vmatprep.subr.mxu0 0.0
    %705 = vmatpush1.msra.mxu0 0.0
    %706 = vmatprep.subr.mxu0 0.0
    %707 = vmatpush1.msra.mxu0 0.0
    %708 = vmatprep.subr.mxu0 0.0
    %709 = vmatpush1.msra.mxu0 0.0
    %710 = vmatprep.subr.mxu0 0.0
    %711 = vmatpush1.msra.mxu0 0.0
    %712 = vmatprep.subr.mxu0 0.0
    %713 = vmatpush1.msra.mxu0 0.0
    %714 = vmatprep.subr.mxu0 0.0
    %715 = vmatpush1.msra.mxu0 0.0
    %716 = vmatprep.subr.mxu0 0.0
    %717 = vmatpush1.msra.mxu0 0.0
    %718 = vmatprep.subr.mxu0 0.0
    %719 = vmatpush1.msra.mxu0 0.0
    %720 = vmatprep.subr.mxu0 0.0
    %721 = vmatpush1.msra.mxu0 0.0
    %722 = vmatprep.subr.mxu0 0.0
    %723 = vmatpush1.msra.mxu0 0.0
    %724 = vmatprep.subr.mxu0 0.0
    %725 = vmatpush1.msra.mxu0 0.0
    %726 = vmatprep.subr.mxu0 0.0
    %727 = vmatpush1.msra.mxu0 0.0
    %728 = vmatprep.mubr.f32.mxu0 %v662
    %729 = vmatmul.mubr.f32.gmra.mrb[0].mxu0 %v656
    %v730 = vpop.f32.mrb[0].mxu0
    %v731 = vadd.f32 0.0, %v730
    %v732 = vpop.f32.mrb[0].mxu0
    %v733 = vadd.f32 0.0, %v732
    %734 = vdwg.mxu0
    %v735 = vstv %s650
    %v736 = vmul.f32 %v735, %v65
    %v737 = vadd.f32 %v68, %v736
    %v738 = vstv %s651
    %v739 = vmul.f32 %v738, %v67
    %v740 = vadd.f32 %v737, %v739
    %v743 = vcombine.low %v731, %v733
    %v745 = vunpack.c.l.s4 1966171168
    %v746 = vunpack.c.0.s8 %v745
    %v747 = vlaneseq
    %v748 = vshrl.u32 %v747, 7
    %v749 = vsub.s32 %v746, %v748
    %v750 = vrot.slane %v743, %v749
    %v752 = vunpack.c.l.s4 1966171168
    %v753 = vunpack.c.0.s8 %v752
    %v754 = vlaneseq
    %v755 = vshrl.u32 %v754, 7
    %v756 = vsub.s32 %v753, %v755
    %v757 = vrot.slane %v750, %v756
    %v759 = vadd.f32 %v740, %v757
    %v760 = vtanh.pop %v759
    %s761 = sld [smem:[#allocation2 + $0x300]]
    %s762 = sld [smem:[#allocation2 + $0x301]]
    %v764 = vlaneseq
    %v765 = vshrl.u32 %v764, 7
    %v766 = vsub.s32 0, %v765
    %v767 = vrot.slane %v760, %v766
    %v768 = vlaneseq
    %v769 = vshrl.u32 %v768, 7
    %v770 = vsub.s32 1, %v769
    %v771 = vrot.slane %v760, %v770
    %v773 = vsel %vm105, %v771, 0
    %775 = vmatprep.subr.mxu0 %v72
    %776 = vmatpush1.msra.mxu0 %v71
    %777 = vmatprep.subr.mxu0 %v74
    %778 = vmatpush1.msra.mxu0 %v73
    %779 = vmatprep.subr.mxu0 %v76
    %780 = vmatpush1.msra.mxu0 %v75
    %781 = vmatprep.subr.mxu0 %v78
    %782 = vmatpush1.msra.mxu0 %v77
    %783 = vmatprep.subr.mxu0 %v80
    %784 = vmatpush1.msra.mxu0 %v79
    %785 = vmatprep.subr.mxu0 %v82
    %786 = vmatpush1.msra.mxu0 %v81
    %787 = vmatprep.subr.mxu0 %v84
    %788 = vmatpush1.msra.mxu0 %v83
    %789 = vmatprep.subr.mxu0 %v86
    %790 = vmatpush1.msra.mxu0 %v85
    %791 = vmatprep.subr.mxu0 %v88
    %792 = vmatpush1.msra.mxu0 %v87
    %793 = vmatprep.subr.mxu0 %v90
    %794 = vmatpush1.msra.mxu0 %v89
    %795 = vmatprep.subr.mxu0 %v92
    %796 = vmatpush1.msra.mxu0 %v91
    %797 = vmatprep.subr.mxu0 %v94
    %798 = vmatpush1.msra.mxu0 %v93
    %799 = vmatprep.subr.mxu0 %v96
    %800 = vmatpush1.msra.mxu0 %v95
    %801 = vmatprep.subr.mxu0 %v98
    %802 = vmatpush1.msra.mxu0 %v97
    %803 = vmatprep.subr.mxu0 %v100
    %804 = vmatpush1.msra.mxu0 %v99
    %805 = vmatprep.subr.mxu0 %v102
    %806 = vmatpush1.msra.mxu0 %v101
    %807 = vmatprep.subr.mxu0 %v104
    %808 = vmatpush1.msra.mxu0 %v103
    %809 = vmatprep.subr.mxu0 0.0
    %810 = vmatpush1.msra.mxu0 0.0
    %811 = vmatprep.subr.mxu0 0.0
    %812 = vmatpush1.msra.mxu0 0.0
    %813 = vmatprep.subr.mxu0 0.0
    %814 = vmatpush1.msra.mxu0 0.0
    %815 = vmatprep.subr.mxu0 0.0
    %816 = vmatpush1.msra.mxu0 0.0
    %817 = vmatprep.subr.mxu0 0.0
    %818 = vmatpush1.msra.mxu0 0.0
    %819 = vmatprep.subr.mxu0 0.0
    %820 = vmatpush1.msra.mxu0 0.0
    %821 = vmatprep.subr.mxu0 0.0
    %822 = vmatpush1.msra.mxu0 0.0
    %823 = vmatprep.subr.mxu0 0.0
    %824 = vmatpush1.msra.mxu0 0.0
    %825 = vmatprep.subr.mxu0 0.0
    %826 = vmatpush1.msra.mxu0 0.0
    %827 = vmatprep.subr.mxu0 0.0
    %828 = vmatpush1.msra.mxu0 0.0
    %829 = vmatprep.subr.mxu0 0.0
    %830 = vmatpush1.msra.mxu0 0.0
    %831 = vmatprep.subr.mxu0 0.0
    %832 = vmatpush1.msra.mxu0 0.0
    %833 = vmatprep.subr.mxu0 0.0
    %834 = vmatpush1.msra.mxu0 0.0
    %835 = vmatprep.subr.mxu0 0.0
    %836 = vmatpush1.msra.mxu0 0.0
    %837 = vmatprep.subr.mxu0 0.0
    %838 = vmatpush1.msra.mxu0 0.0
    %839 = vmatprep.mubr.f32.mxu0 %v773
    %840 = vmatmul.mubr.f32.gmra.mrb[0].mxu0 %v767
    %v841 = vpop.f32.mrb[0].mxu0
    %v842 = vadd.f32 0.0, %v841
    %v843 = vpop.f32.mrb[0].mxu0
    %v844 = vadd.f32 0.0, %v843
    %845 = vdwg.mxu0
    %v846 = vstv %s761
    %v847 = vmul.f32 %v846, %v65
    %v848 = vadd.f32 %v68, %v847
    %v849 = vstv %s762
    %v850 = vmul.f32 %v849, %v67
    %v851 = vadd.f32 %v848, %v850
    %v854 = vcombine.low %v842, %v844
    %v856 = vunpack.c.l.s4 1966171168
    %v857 = vunpack.c.0.s8 %v856
    %v858 = vlaneseq
    %v859 = vshrl.u32 %v858, 7
    %v860 = vsub.s32 %v857, %v859
    %v861 = vrot.slane %v854, %v860
    %v863 = vunpack.c.l.s4 1966171168
    %v864 = vunpack.c.0.s8 %v863
    %v865 = vlaneseq
    %v866 = vshrl.u32 %v865, 7
    %v867 = vsub.s32 %v864, %v866
    %v868 = vrot.slane %v861, %v867
    %v870 = vadd.f32 %v851, %v868
    %v871 = vtanh.pop %v870
    %s872 = sld [smem:[#allocation2 + $0x380]]
    %s873 = sld [smem:[#allocation2 + $0x381]]
    %v875 = vlaneseq
    %v876 = vshrl.u32 %v875, 7
    %v877 = vsub.s32 0, %v876
    %v878 = vrot.slane %v871, %v877
    %v879 = vlaneseq
    %v880 = vshrl.u32 %v879, 7
    %v881 = vsub.s32 1, %v880
    %v882 = vrot.slane %v871, %v881
    %v884 = vsel %vm105, %v882, 0
    %886 = vmatprep.subr.mxu0 %v72
    %887 = vmatpush1.msra.mxu0 %v71
    %888 = vmatprep.subr.mxu0 %v74
    %889 = vmatpush1.msra.mxu0 %v73
    %890 = vmatprep.subr.mxu0 %v76
    %891 = vmatpush1.msra.mxu0 %v75
    %892 = vmatprep.subr.mxu0 %v78
    %893 = vmatpush1.msra.mxu0 %v77
    %894 = vmatprep.subr.mxu0 %v80
    %895 = vmatpush1.msra.mxu0 %v79
    %896 = vmatprep.subr.mxu0 %v82
    %897 = vmatpush1.msra.mxu0 %v81
    %898 = vmatprep.subr.mxu0 %v84
    %899 = vmatpush1.msra.mxu0 %v83
    %900 = vmatprep.subr.mxu0 %v86
    %901 = vmatpush1.msra.mxu0 %v85
    %902 = vmatprep.subr.mxu0 %v88
    %903 = vmatpush1.msra.mxu0 %v87
    %904 = vmatprep.subr.mxu0 %v90
    %905 = vmatpush1.msra.mxu0 %v89
    %906 = vmatprep.subr.mxu0 %v92
    %907 = vmatpush1.msra.mxu0 %v91
    %908 = vmatprep.subr.mxu0 %v94
    %909 = vmatpush1.msra.mxu0 %v93
    %910 = vmatprep.subr.mxu0 %v96
    %911 = vmatpush1.msra.mxu0 %v95
    %912 = vmatprep.subr.mxu0 %v98
    %913 = vmatpush1.msra.mxu0 %v97
    %914 = vmatprep.subr.mxu0 %v100
    %915 = vmatpush1.msra.mxu0 %v99
    %916 = vmatprep.subr.mxu0 %v102
    %917 = vmatpush1.msra.mxu0 %v101
    %918 = vmatprep.subr.mxu0 %v104
    %919 = vmatpush1.msra.mxu0 %v103
    %920 = vmatprep.subr.mxu0 0.0
    %921 = vmatpush1.msra.mxu0 0.0
    %922 = vmatprep.subr.mxu0 0.0
    %923 = vmatpush1.msra.mxu0 0.0
    %924 = vmatprep.subr.mxu0 0.0
    %925 = vmatpush1.msra.mxu0 0.0
    %926 = vmatprep.subr.mxu0 0.0
    %927 = vmatpush1.msra.mxu0 0.0
    %928 = vmatprep.subr.mxu0 0.0
    %929 = vmatpush1.msra.mxu0 0.0
    %930 = vmatprep.subr.mxu0 0.0
    %931 = vmatpush1.msra.mxu0 0.0
    %932 = vmatprep.subr.mxu0 0.0
    %933 = vmatpush1.msra.mxu0 0.0
    %934 = vmatprep.subr.mxu0 0.0
    %935 = vmatpush1.msra.mxu0 0.0
    %936 = vmatprep.subr.mxu0 0.0
    %937 = vmatpush1.msra.mxu0 0.0
    %938 = vmatprep.subr.mxu0 0.0
    %939 = vmatpush1.msra.mxu0 0.0
    %940 = vmatprep.subr.mxu0 0.0
    %941 = vmatpush1.msra.mxu0 0.0
    %942 = vmatprep.subr.mxu0 0.0
    %943 = vmatpush1.msra.mxu0 0.0
    %944 = vmatprep.subr.mxu0 0.0
    %945 = vmatpush1.msra.mxu0 0.0
    %946 = vmatprep.subr.mxu0 0.0
    %947 = vmatpush1.msra.mxu0 0.0
    %948 = vmatprep.subr.mxu0 0.0
    %949 = vmatpush1.msra.mxu0 0.0
    %950 = vmatprep.mubr.f32.mxu0 %v884
    %951 = vmatmul.mubr.f32.gmra.mrb[0].mxu0 %v878
    %v952 = vpop.f32.mrb[0].mxu0
    %v953 = vadd.f32 0.0, %v952
    %v954 = vpop.f32.mrb[0].mxu0
    %v955 = vadd.f32 0.0, %v954
    %956 = vdwg.mxu0
    %v957 = vstv %s872
    %v958 = vmul.f32 %v957, %v65
    %v959 = vadd.f32 %v68, %v958
    %v960 = vstv %s873
    %v961 = vmul.f32 %v960, %v67
    %v962 = vadd.f32 %v959, %v961
    %v965 = vcombine.low %v953, %v955
    %v967 = vunpack.c.l.s4 1966171168
    %v968 = vunpack.c.0.s8 %v967
    %v969 = vlaneseq
    %v970 = vshrl.u32 %v969, 7
    %v971 = vsub.s32 %v968, %v970
    %v972 = vrot.slane %v965, %v971
    %v974 = vunpack.c.l.s4 1966171168
    %v975 = vunpack.c.0.s8 %v974
    %v976 = vlaneseq
    %v977 = vshrl.u32 %v976, 7
    %v978 = vsub.s32 %v975, %v977
    %v979 = vrot.slane %v972, %v978
    %v981 = vadd.f32 %v962, %v979
    %v982 = vtanh.pop %v981
    %v983 = vld [vmem:[#allocation7] sm:$0xff]
    %v984 = vld [vmem:[#allocation7 + $0x8] sm:$0xff]
    %v985 = vld [vmem:[#allocation7 + $0x10] sm:$0xff]
    %v986 = vld [vmem:[#allocation7 + $0x18] sm:$0xff]
    %v987 = vld [vmem:[#allocation7 + $0x20] sm:$0xff]
    %v988 = vld [vmem:[#allocation7 + $0x28] sm:$0xff]
    %v989 = vld [vmem:[#allocation7 + $0x30] sm:$0xff]
    %v990 = vld [vmem:[#allocation7 + $0x38] sm:$0xff]
    %v991 = vld [vmem:[#allocation7 + $0x40] sm:$0xff]
    %v992 = vld [vmem:[#allocation7 + $0x48] sm:$0xff]
    %v993 = vld [vmem:[#allocation7 + $0x50] sm:$0xff]
    %v994 = vld [vmem:[#allocation7 + $0x58] sm:$0xff]
    %v995 = vld [vmem:[#allocation7 + $0x60] sm:$0xff]
    %v996 = vld [vmem:[#allocation7 + $0x68] sm:$0xff]
    %v997 = vld [vmem:[#allocation7 + $0x70] sm:$0xff]
    %v998 = vld [vmem:[#allocation7 + $0x78] sm:$0xff]
    %v999 = vld [vmem:[#allocation7 + $0x80] sm:$0xff]
    %v1000 = vld [vmem:[%s5] sm:$0x1]
    %v1002 = vlaneseq
    %v1003 = vshrl.u32 %v1002, 7
    %v1004 = vsub.s32 0, %v1003
    %v1005 = vrot.slane %v982, %v1004
    %v1006 = vlaneseq
    %v1007 = vshrl.u32 %v1006, 7
    %v1008 = vsub.s32 1, %v1007
    %v1009 = vrot.slane %v982, %v1008
    %v1011 = vsel %vm105, %v1009, 0
    %1013 = vmatprep.subr.mxu0 0.0
    %1014 = vmatpush1.msra.mxu0 %v983
    %1015 = vmatprep.subr.mxu0 0.0
    %1016 = vmatpush1.msra.mxu0 %v984
    %1017 = vmatprep.subr.mxu0 0.0
    %1018 = vmatpush1.msra.mxu0 %v985
    %1019 = vmatprep.subr.mxu0 0.0
    %1020 = vmatpush1.msra.mxu0 %v986
    %1021 = vmatprep.subr.mxu0 0.0
    %1022 = vmatpush1.msra.mxu0 %v987
    %1023 = vmatprep.subr.mxu0 0.0
    %1024 = vmatpush1.msra.mxu0 %v988
    %1025 = vmatprep.subr.mxu0 0.0
    %1026 = vmatpush1.msra.mxu0 %v989
    %1027 = vmatprep.subr.mxu0 0.0
    %1028 = vmatpush1.msra.mxu0 %v990
    %1029 = vmatprep.subr.mxu0 0.0
    %1030 = vmatpush1.msra.mxu0 %v991
    %1031 = vmatprep.subr.mxu0 0.0
    %1032 = vmatpush1.msra.mxu0 %v992
    %1033 = vmatprep.subr.mxu0 0.0
    %1034 = vmatpush1.msra.mxu0 %v993
    %1035 = vmatprep.subr.mxu0 0.0
    %1036 = vmatpush1.msra.mxu0 %v994
    %1037 = vmatprep.subr.mxu0 0.0
    %1038 = vmatpush1.msra.mxu0 %v995
    %1039 = vmatprep.subr.mxu0 0.0
    %1040 = vmatpush1.msra.mxu0 %v996
    %1041 = vmatprep.subr.mxu0 0.0
    %1042 = vmatpush1.msra.mxu0 %v997
    %1043 = vmatprep.subr.mxu0 0.0
    %1044 = vmatpush1.msra.mxu0 %v998
    %1045 = vmatprep.subr.mxu0 0.0
    %1046 = vmatpush1.msra.mxu0 %v999
    %1047 = vmatprep.subr.mxu0 0.0
    %1048 = vmatpush1.msra.mxu0 0.0
    %1049 = vmatprep.subr.mxu0 0.0
    %1050 = vmatpush1.msra.mxu0 0.0
    %1051 = vmatprep.subr.mxu0 0.0
    %1052 = vmatpush1.msra.mxu0 0.0
    %1053 = vmatprep.subr.mxu0 0.0
    %1054 = vmatpush1.msra.mxu0 0.0
    %1055 = vmatprep.subr.mxu0 0.0
    %1056 = vmatpush1.msra.mxu0 0.0
    %1057 = vmatprep.subr.mxu0 0.0
    %1058 = vmatpush1.msra.mxu0 0.0
    %1059 = vmatprep.subr.mxu0 0.0
    %1060 = vmatpush1.msra.mxu0 0.0
    %1061 = vmatprep.subr.mxu0 0.0
    %1062 = vmatpush1.msra.mxu0 0.0
    %1063 = vmatprep.subr.mxu0 0.0
    %1064 = vmatpush1.msra.mxu0 0.0
    %1065 = vmatprep.subr.mxu0 0.0
    %1066 = vmatpush1.msra.mxu0 0.0
    %1067 = vmatprep.subr.mxu0 0.0
    %1068 = vmatpush1.msra.mxu0 0.0
    %1069 = vmatprep.subr.mxu0 0.0
    %1070 = vmatpush1.msra.mxu0 0.0
    %1071 = vmatprep.subr.mxu0 0.0
    %1072 = vmatpush1.msra.mxu0 0.0
    %1073 = vmatprep.subr.mxu0 0.0
    %1074 = vmatpush1.msra.mxu0 0.0
    %1075 = vmatprep.subr.mxu0 0.0
    %1076 = vmatpush1.msra.mxu0 0.0
    %1077 = vmatprep.mubr.f32.mxu0 %v1011
    %1078 = vmatmul.mubr.f32.gmra.mrb[0].mxu0 %v1005
    %v1079 = vpop.f32.mrb[0].mxu0
    %v1080 = vadd.f32 %v1000, %v1079
    %v1081 = vpop.f32.mrb[0].mxu0
    %1082 = vdwg.mxu0
    %vm1083 = vcmask 548864
    %1084 = vst.msk [vmem:[#allocation9] sm:$0x1] %vm1083, %v1080
    // Predicated region
    $region38: #{tpu_custom_call.1} parent=1 // pred_check
      _
    $region39: #{tpu_custom_call.1} parent=1 // pred_check_branch
      %1086 = sbr.rel (0) target = $region41
    $region40: #{tpu_custom_call.1} parent=1 // pred_region
      %s1088 = ssub.s32 16, 16
      %1089 = vsyncadd [#allocation4], %s1088
      %s1091 = sshll.u32 [#allocation9], 4
      %s1092 = int_to_ptr.vmem [resolvable:$true] %s1091
      %1094 = dma.vmem_to_hbm [thread:$0]  %s1092, 16, %s6, [#allocation4]
    $region41: #{tpu_custom_call.1} parent=1 // pred_fallthru
      _
    // Predicated region
    $region42: #{tpu_custom_call.1} parent=1 // pred_check
      _
    $region43: #{tpu_custom_call.1} parent=1 // pred_check_branch
      %1096 = sbr.rel (0) target = $region45
    $region44: #{tpu_custom_call.1} parent=1 // pred_region
      %1097 = dma.done [#allocation4], 16
    $region45: #{tpu_custom_call.1} parent=1 // pred_fallthru
      _
    %1098 = vsyncpa [#allocation3], 1
    %1099 = vsyncpa [#allocation8], 1
    %1100 = vsyncpa [#allocation4], 1
    %1101 = vsyncpa [#allocation5], 1

</llo_original>
